<compile_context>
chip_gen: v5e
topology: v5e:2x2
jax: 0.10.0
libtpu: 0.0.40
codegen_flags: <defaults>
</compile_context>

<pallas_src>
import functools

import jax
import jax.numpy as jnp
from jax.experimental import pallas as pl
from jax.experimental.pallas import tpu as pltpu


def attention_kernel(
    x_ref,        # (N_pad, C)  input tokens for batch b (bf16)
    wqkv_ref,     # (C, 3C)     fused QKV weight, scale folded into q cols (bf16)
    wproj_ref,    # (C, C)      output projection weight (bf16)
    bproj_ref,    # (1, C)      output projection bias (f32)
    o_ref,        # (N_pad, C)  output for batch b
    *,
    num_heads,
    head_dim,
    n_valid,
):
    n_pad = x_ref.shape[0]
    C = num_heads * head_dim

    x = x_ref[...]                                                    # (N, C) bf16

    # One fused QKV matmul — output minor dim 3C saturates the MXU.
    qkv = jnp.dot(x, wqkv_ref[...],
                  preferred_element_type=jnp.float32)                 # (N, 3C) f32
    qkv = qkv.astype(jnp.bfloat16)

    if n_valid < n_pad:
        key_mask = jax.lax.broadcasted_iota(jnp.int32, (1, n_pad), 1) < n_valid

    ctx_parts = []
    for h in range(num_heads):                                        # static unroll
        # Static lane slices; q already carries the 1/sqrt(hd) scale.
        q = qkv[:, h * head_dim:(h + 1) * head_dim]                   # (N, hd)
        k = qkv[:, C + h * head_dim:C + (h + 1) * head_dim]           # (N, hd)
        v = qkv[:, 2 * C + h * head_dim:2 * C + (h + 1) * head_dim]   # (N, hd)

        # Scores: contract head_dim of both operands — the k-transpose is
        # absorbed into the matmul (no XLU transpose materialized).
        s = jax.lax.dot_general(
            q, k,
            dimension_numbers=(((1,), (1,)), ((), ())),
            preferred_element_type=jnp.float32)                       # (N, N) f32

        if n_valid < n_pad:
            s = jnp.where(key_mask, s, -1e30)                         # mask padded keys

        # Hand-rolled softmax; the divide goes to the EUP reciprocal slot.
        m = jnp.max(s, axis=-1, keepdims=True)
        p = jnp.exp(s - m)
        denom = jnp.sum(p, axis=-1, keepdims=True)
        p = p * pl.reciprocal(denom, approx=True)

        ctx_parts.append(
            jnp.dot(p.astype(jnp.bfloat16), v,
                    preferred_element_type=jnp.float32).astype(jnp.bfloat16))

    # Head "concat" is a lane-dim concatenate — feeds ONE fused projection.
    ctx = jnp.concatenate(ctx_parts, axis=-1)                         # (N, C) bf16

    out = jnp.dot(ctx, wproj_ref[...],
                  preferred_element_type=jnp.float32)                 # (N, C) f32
    o_ref[...] = (out + bproj_ref[...]).astype(o_ref.dtype)


def attention_forward(x, wqkv, wproj, bproj, *, num_heads):
    """x: (B, N, C). wqkv: (3C, C) torch layout. wproj: (C, C). bproj: (C,)."""
    B, N, C = x.shape
    assert C % num_heads == 0
    hd = C // num_heads
    scale = hd ** (-0.5)

    # Pad tokens up to a sublane multiple; padded key columns are masked
    # inside the kernel, padded query rows are sliced off below.
    n_pad = ((N + 7) // 8) * 8
    x_in = x.astype(jnp.bfloat16)                                     # bf16 DMA
    if n_pad != N:
        x_in = jnp.pad(x_in, ((0, 0), (0, n_pad - N), (0, 0)))

    # Torch-layout weights -> matmul-ready bf16 slabs (one-time wrapper cost).
    # Fold the softmax scale into the q columns so there is no in-kernel mul.
    wqkv_t = wqkv.T                                                   # (C, 3C)
    col_scale = jnp.concatenate(
        [jnp.full((C,), scale, jnp.float32), jnp.ones((2 * C,), jnp.float32)])
    wqkv_b = (wqkv_t * col_scale[None, :]).astype(jnp.bfloat16)       # (C, 3C)
    wproj_b = wproj.T.astype(jnp.bfloat16)                            # (C, C)
    bproj_f = bproj.reshape(1, C).astype(jnp.float32)                 # (1, C)

    kernel = functools.partial(
        attention_kernel, num_heads=num_heads, head_dim=hd, n_valid=N)

    out = pl.pallas_call(
        kernel,
        out_shape=jax.ShapeDtypeStruct((B, n_pad, C), x.dtype),
        grid=(B,),
        in_specs=[
            pl.BlockSpec((None, n_pad, C), lambda b: (b, 0, 0)),   # x (per batch)
            pl.BlockSpec((C, 3 * C), lambda b: (0, 0)),            # wqkv (VMEM-resident)
            pl.BlockSpec((C, C), lambda b: (0, 0)),                # wproj (VMEM-resident)
            pl.BlockSpec((1, C), lambda b: (0, 0)),                # bias (VMEM-resident)
        ],
        out_specs=pl.BlockSpec((None, n_pad, C), lambda b: (b, 0, 0)),
        compiler_params=pltpu.CompilerParams(
            dimension_semantics=("parallel",),
            vmem_limit_bytes=32 * 1024 * 1024),
    )(x_in, wqkv_b, wproj_b, bproj_f)

    if n_pad != N:
        out = out[:, :N, :]
    return out


def reference_attention(x, wqkv, wproj, bproj, *, num_heads):
    """Pure-JAX f32 reference of the PyTorch Attention module."""
    B, N, C = x.shape
    hd = C // num_heads
    scale = hd ** (-0.5)
    qkv = x @ wqkv.T                                                  # (B, N, 3C)
    qkv = qkv.reshape(B, N, 3, num_heads, hd).transpose(2, 0, 3, 1, 4)
    q, k, v = qkv[0], qkv[1], qkv[2]                                  # (B, H, N, hd)
    attn = jnp.einsum("bhnd,bhmd->bhnm", q, k) * scale
    attn = jax.nn.softmax(attn, axis=-1)
    o = jnp.einsum("bhnm,bhmd->bhnd", attn, v)
    o = o.transpose(0, 2, 1, 3).reshape(B, N, C)
    return o @ wproj.T + bproj


if __name__ == "__main__":
    B, N, C = 2, 16, 128
    num_heads = 4

    key = jax.random.PRNGKey(0)
    kx, k1, k2, k3 = jax.random.split(key, 4)
    x = jax.random.normal(kx, (B, N, C), jnp.float32)
    wqkv = 0.05 * jax.random.normal(k1, (3 * C, C), jnp.float32)      # torch (out, in)
    wproj = 0.05 * jax.random.normal(k2, (C, C), jnp.float32)
    bproj = 0.02 * jax.random.normal(k3, (C,), jnp.float32)

    out = attention_forward(x, wqkv, wproj, bproj, num_heads=num_heads)
    out = jax.block_until_ready(out)

    ref = reference_attention(x, wqkv, wproj, bproj, num_heads=num_heads)
    assert out.shape == (B, N, C)
    # bf16 MXU operands with f32 accumulation -> looser tolerance than pure f32.
    err = float(jnp.max(jnp.abs(out - ref)))
    assert jnp.allclose(out, ref, atol=2e-2, rtol=2e-2), f"mismatch, max err {err}"

    print("KERNEL_OK")
</pallas_src>

<mosaic_0001>
module attributes {stable_mosaic.version = 11 : i64} {
  func.func @attention_kernel(%arg0: i32, %arg1: memref<1x16x128xbf16, #tpu.memory_space<vmem>>, %arg2: memref<128x384xbf16, #tpu.memory_space<vmem>>, %arg3: memref<128x128xbf16, #tpu.memory_space<vmem>>, %arg4: memref<1x128xf32, #tpu.memory_space<vmem>>, %arg5: memref<1x16x128xf32, #tpu.memory_space<vmem>>) attributes {dimension_semantics = [#tpu.dimension_semantics<parallel>], iteration_bounds = array<i64: 2>, scalar_prefetch = 0 : i64, scratch_operands = 0 : i64, tpu.core_type = #tpu.core_type<tc>, window_params = [{transform_indices = @transform_0, window_bounds = array<i64: 1, 16, 128>}, {pipeline_mode = #tpu.pipeline_mode<synchronous>, transform_indices = @transform_1, window_bounds = array<i64: 128, 384>}, {pipeline_mode = #tpu.pipeline_mode<synchronous>, transform_indices = @transform_2, window_bounds = array<i64: 128, 128>}, {pipeline_mode = #tpu.pipeline_mode<synchronous>, transform_indices = @transform_3, window_bounds = array<i64: 1, 128>}, {transform_indices = @transform_4, window_bounds = array<i64: 1, 16, 128>}]} {
    %c0 = arith.constant 0 : index
    %c0_0 = arith.constant 0 : index
    %c0_1 = arith.constant 0 : index
    %0 = vector.load %arg1[%c0, %c0_0, %c0_1] : memref<1x16x128xbf16, #tpu.memory_space<vmem>>, vector<1x16x128xbf16>
    %1 = vector.shape_cast %0 : vector<1x16x128xbf16> to vector<16x128xbf16>
    %c0_2 = arith.constant 0 : index
    %c0_3 = arith.constant 0 : index
    %2 = vector.load %arg2[%c0_2, %c0_3] : memref<128x384xbf16, #tpu.memory_space<vmem>>, vector<128x384xbf16>
    %cst = arith.constant dense<0.000000e+00> : vector<16x384xf32>
    %3 = tpu.matmul %1, %2, %cst {dimension_numbers = #tpu.dot_dimension_numbers<[1], [0], [0], [1], [0, 0, 1, 1], [], []>} : vector<16x128xbf16>, vector<128x384xbf16>, vector<16x384xf32> -> vector<16x384xf32>
    %4 = arith.truncf %3 : vector<16x384xf32> to vector<16x384xbf16>
    %5 = vector.extract_strided_slice %4 {offsets = [0, 0], sizes = [16, 32], strides = [1, 1]} : vector<16x384xbf16> to vector<16x32xbf16>
    %6 = vector.extract_strided_slice %4 {offsets = [0, 128], sizes = [16, 32], strides = [1, 1]} : vector<16x384xbf16> to vector<16x32xbf16>
    %7 = vector.extract_strided_slice %4 {offsets = [0, 256], sizes = [16, 32], strides = [1, 1]} : vector<16x384xbf16> to vector<16x32xbf16>
    %cst_4 = arith.constant dense<0.000000e+00> : vector<16x16xf32>
    %8 = tpu.matmul %5, %6, %cst_4 {dimension_numbers = #tpu.dot_dimension_numbers<[1], [1], [0], [0], [0, 0, 1, 0], [], []>} : vector<16x32xbf16>, vector<16x32xbf16>, vector<16x16xf32> -> vector<16x16xf32>
    %cst_5 = arith.constant dense<0xFF800000> : vector<16xf32>
    %9 = vector.multi_reduction <maximumf>, %8, %cst_5 [1] : vector<16x16xf32> to vector<16xf32>
    %10 = vector.shape_cast %9 : vector<16xf32> to vector<16x1xf32>
    %11 = vector.broadcast %10 : vector<16x1xf32> to vector<16x16xf32>
    %12 = arith.subf %8, %11 : vector<16x16xf32>
    %13 = math.exp %12 : vector<16x16xf32>
    %cst_6 = arith.constant dense<0.000000e+00> : vector<16xf32>
    %14 = vector.multi_reduction <add>, %13, %cst_6 [1] : vector<16x16xf32> to vector<16xf32>
    %15 = vector.shape_cast %14 : vector<16xf32> to vector<16x1xf32>
    %16 = tpu.reciprocal %15 {approx = true} : vector<16x1xf32> -> vector<16x1xf32>
    %17 = vector.broadcast %16 : vector<16x1xf32> to vector<16x16xf32>
    %18 = arith.mulf %13, %17 : vector<16x16xf32>
    %19 = arith.truncf %18 : vector<16x16xf32> to vector<16x16xbf16>
    %cst_7 = arith.constant dense<0.000000e+00> : vector<16x32xf32>
    %20 = tpu.matmul %19, %7, %cst_7 {dimension_numbers = #tpu.dot_dimension_numbers<[1], [0], [0], [1], [0, 0, 1, 1], [], []>} : vector<16x16xbf16>, vector<16x32xbf16>, vector<16x32xf32> -> vector<16x32xf32>
    %21 = arith.truncf %20 : vector<16x32xf32> to vector<16x32xbf16>
    %22 = vector.extract_strided_slice %4 {offsets = [0, 32], sizes = [16, 32], strides = [1, 1]} : vector<16x384xbf16> to vector<16x32xbf16>
    %23 = vector.extract_strided_slice %4 {offsets = [0, 160], sizes = [16, 32], strides = [1, 1]} : vector<16x384xbf16> to vector<16x32xbf16>
    %24 = vector.extract_strided_slice %4 {offsets = [0, 288], sizes = [16, 32], strides = [1, 1]} : vector<16x384xbf16> to vector<16x32xbf16>
    %cst_8 = arith.constant dense<0.000000e+00> : vector<16x16xf32>
    %25 = tpu.matmul %22, %23, %cst_8 {dimension_numbers = #tpu.dot_dimension_numbers<[1], [1], [0], [0], [0, 0, 1, 0], [], []>} : vector<16x32xbf16>, vector<16x32xbf16>, vector<16x16xf32> -> vector<16x16xf32>
    %cst_9 = arith.constant dense<0xFF800000> : vector<16xf32>
    %26 = vector.multi_reduction <maximumf>, %25, %cst_9 [1] : vector<16x16xf32> to vector<16xf32>
    %27 = vector.shape_cast %26 : vector<16xf32> to vector<16x1xf32>
    %28 = vector.broadcast %27 : vector<16x1xf32> to vector<16x16xf32>
    %29 = arith.subf %25, %28 : vector<16x16xf32>
    %30 = math.exp %29 : vector<16x16xf32>
    %cst_10 = arith.constant dense<0.000000e+00> : vector<16xf32>
    %31 = vector.multi_reduction <add>, %30, %cst_10 [1] : vector<16x16xf32> to vector<16xf32>
    %32 = vector.shape_cast %31 : vector<16xf32> to vector<16x1xf32>
    %33 = tpu.reciprocal %32 {approx = true} : vector<16x1xf32> -> vector<16x1xf32>
    %34 = vector.broadcast %33 : vector<16x1xf32> to vector<16x16xf32>
    %35 = arith.mulf %30, %34 : vector<16x16xf32>
    %36 = arith.truncf %35 : vector<16x16xf32> to vector<16x16xbf16>
    %cst_11 = arith.constant dense<0.000000e+00> : vector<16x32xf32>
    %37 = tpu.matmul %36, %24, %cst_11 {dimension_numbers = #tpu.dot_dimension_numbers<[1], [0], [0], [1], [0, 0, 1, 1], [], []>} : vector<16x16xbf16>, vector<16x32xbf16>, vector<16x32xf32> -> vector<16x32xf32>
    %38 = arith.truncf %37 : vector<16x32xf32> to vector<16x32xbf16>
    %39 = vector.extract_strided_slice %4 {offsets = [0, 64], sizes = [16, 32], strides = [1, 1]} : vector<16x384xbf16> to vector<16x32xbf16>
    %40 = vector.extract_strided_slice %4 {offsets = [0, 192], sizes = [16, 32], strides = [1, 1]} : vector<16x384xbf16> to vector<16x32xbf16>
    %41 = vector.extract_strided_slice %4 {offsets = [0, 320], sizes = [16, 32], strides = [1, 1]} : vector<16x384xbf16> to vector<16x32xbf16>
    %cst_12 = arith.constant dense<0.000000e+00> : vector<16x16xf32>
    %42 = tpu.matmul %39, %40, %cst_12 {dimension_numbers = #tpu.dot_dimension_numbers<[1], [1], [0], [0], [0, 0, 1, 0], [], []>} : vector<16x32xbf16>, vector<16x32xbf16>, vector<16x16xf32> -> vector<16x16xf32>
    %cst_13 = arith.constant dense<0xFF800000> : vector<16xf32>
    %43 = vector.multi_reduction <maximumf>, %42, %cst_13 [1] : vector<16x16xf32> to vector<16xf32>
    %44 = vector.shape_cast %43 : vector<16xf32> to vector<16x1xf32>
    %45 = vector.broadcast %44 : vector<16x1xf32> to vector<16x16xf32>
    %46 = arith.subf %42, %45 : vector<16x16xf32>
    %47 = math.exp %46 : vector<16x16xf32>
    %cst_14 = arith.constant dense<0.000000e+00> : vector<16xf32>
    %48 = vector.multi_reduction <add>, %47, %cst_14 [1] : vector<16x16xf32> to vector<16xf32>
    %49 = vector.shape_cast %48 : vector<16xf32> to vector<16x1xf32>
    %50 = tpu.reciprocal %49 {approx = true} : vector<16x1xf32> -> vector<16x1xf32>
    %51 = vector.broadcast %50 : vector<16x1xf32> to vector<16x16xf32>
    %52 = arith.mulf %47, %51 : vector<16x16xf32>
    %53 = arith.truncf %52 : vector<16x16xf32> to vector<16x16xbf16>
    %cst_15 = arith.constant dense<0.000000e+00> : vector<16x32xf32>
    %54 = tpu.matmul %53, %41, %cst_15 {dimension_numbers = #tpu.dot_dimension_numbers<[1], [0], [0], [1], [0, 0, 1, 1], [], []>} : vector<16x16xbf16>, vector<16x32xbf16>, vector<16x32xf32> -> vector<16x32xf32>
    %55 = arith.truncf %54 : vector<16x32xf32> to vector<16x32xbf16>
    %56 = vector.extract_strided_slice %4 {offsets = [0, 96], sizes = [16, 32], strides = [1, 1]} : vector<16x384xbf16> to vector<16x32xbf16>
    %57 = vector.extract_strided_slice %4 {offsets = [0, 224], sizes = [16, 32], strides = [1, 1]} : vector<16x384xbf16> to vector<16x32xbf16>
    %58 = vector.extract_strided_slice %4 {offsets = [0, 352], sizes = [16, 32], strides = [1, 1]} : vector<16x384xbf16> to vector<16x32xbf16>
    %cst_16 = arith.constant dense<0.000000e+00> : vector<16x16xf32>
    %59 = tpu.matmul %56, %57, %cst_16 {dimension_numbers = #tpu.dot_dimension_numbers<[1], [1], [0], [0], [0, 0, 1, 0], [], []>} : vector<16x32xbf16>, vector<16x32xbf16>, vector<16x16xf32> -> vector<16x16xf32>
    %cst_17 = arith.constant dense<0xFF800000> : vector<16xf32>
    %60 = vector.multi_reduction <maximumf>, %59, %cst_17 [1] : vector<16x16xf32> to vector<16xf32>
    %61 = vector.shape_cast %60 : vector<16xf32> to vector<16x1xf32>
    %62 = vector.broadcast %61 : vector<16x1xf32> to vector<16x16xf32>
    %63 = arith.subf %59, %62 : vector<16x16xf32>
    %64 = math.exp %63 : vector<16x16xf32>
    %cst_18 = arith.constant dense<0.000000e+00> : vector<16xf32>
    %65 = vector.multi_reduction <add>, %64, %cst_18 [1] : vector<16x16xf32> to vector<16xf32>
    %66 = vector.shape_cast %65 : vector<16xf32> to vector<16x1xf32>
    %67 = tpu.reciprocal %66 {approx = true} : vector<16x1xf32> -> vector<16x1xf32>
    %68 = vector.broadcast %67 : vector<16x1xf32> to vector<16x16xf32>
    %69 = arith.mulf %64, %68 : vector<16x16xf32>
    %70 = arith.truncf %69 : vector<16x16xf32> to vector<16x16xbf16>
    %cst_19 = arith.constant dense<0.000000e+00> : vector<16x32xf32>
    %71 = tpu.matmul %70, %58, %cst_19 {dimension_numbers = #tpu.dot_dimension_numbers<[1], [0], [0], [1], [0, 0, 1, 1], [], []>} : vector<16x16xbf16>, vector<16x32xbf16>, vector<16x32xf32> -> vector<16x32xf32>
    %72 = arith.truncf %71 : vector<16x32xf32> to vector<16x32xbf16>
    %73 = tpu.concatenate %21, %38, %55, %72 in 1 : vector<16x32xbf16>, vector<16x32xbf16>, vector<16x32xbf16>, vector<16x32xbf16> -> vector<16x128xbf16>
    %c0_20 = arith.constant 0 : index
    %c0_21 = arith.constant 0 : index
    %74 = vector.load %arg3[%c0_20, %c0_21] : memref<128x128xbf16, #tpu.memory_space<vmem>>, vector<128x128xbf16>
    %cst_22 = arith.constant dense<0.000000e+00> : vector<16x128xf32>
    %75 = tpu.matmul %73, %74, %cst_22 {dimension_numbers = #tpu.dot_dimension_numbers<[1], [0], [0], [1], [0, 0, 1, 1], [], []>} : vector<16x128xbf16>, vector<128x128xbf16>, vector<16x128xf32> -> vector<16x128xf32>
    %c0_23 = arith.constant 0 : index
    %c0_24 = arith.constant 0 : index
    %76 = vector.load %arg4[%c0_23, %c0_24] : memref<1x128xf32, #tpu.memory_space<vmem>>, vector<1x128xf32>
    %77 = vector.broadcast %76 : vector<1x128xf32> to vector<16x128xf32>
    %78 = arith.addf %75, %77 : vector<16x128xf32>
    %c0_25 = arith.constant 0 : index
    %c0_26 = arith.constant 0 : index
    %c0_27 = arith.constant 0 : index
    %79 = vector.load %arg5[%c0_25, %c0_26, %c0_27] : memref<1x16x128xf32, #tpu.memory_space<vmem>>, vector<1x16x128xf32>
    %80 = vector.shape_cast %79 : vector<1x16x128xf32> to vector<16x128xf32>
    %81 = vector.shape_cast %78 : vector<16x128xf32> to vector<1x16x128xf32>
    tpu.vector_store %arg5[%c0_25, %c0_26, %c0_27], %81 {strides = array<i32>} : memref<1x16x128xf32, #tpu.memory_space<vmem>>, vector<1x16x128xf32>,
    return
  }
  func.func @transform_0(%arg0: i32) -> (i32, i32, i32) {
    %c0_i32 = arith.constant 0 : i32
    %c0_i32_0 = arith.constant 0 : i32
    %c0_i32_1 = arith.constant 0 : i32
    return %arg0, %c0_i32, %c0_i32_0 : i32, i32, i32
  }
  func.func @transform_1(%arg0: i32) -> (i32, i32) {
    %c0_i32 = arith.constant 0 : i32
    %c0_i32_0 = arith.constant 0 : i32
    %c0_i32_1 = arith.constant 0 : i32
    return %c0_i32, %c0_i32_0 : i32, i32
  }
  func.func @transform_2(%arg0: i32) -> (i32, i32) {
    %c0_i32 = arith.constant 0 : i32
    %c0_i32_0 = arith.constant 0 : i32
    %c0_i32_1 = arith.constant 0 : i32
    return %c0_i32, %c0_i32_0 : i32, i32
  }
  func.func @transform_3(%arg0: i32) -> (i32, i32) {
    %c0_i32 = arith.constant 0 : i32
    %c0_i32_0 = arith.constant 0 : i32
    %c0_i32_1 = arith.constant 0 : i32
    return %c0_i32, %c0_i32_0 : i32, i32
  }
  func.func @transform_4(%arg0: i32) -> (i32, i32, i32) {
    %c0_i32 = arith.constant 0 : i32
    %c0_i32_0 = arith.constant 0 : i32
    %c0_i32_1 = arith.constant 0 : i32
    return %arg0, %c0_i32, %c0_i32_0 : i32, i32, i32
  }
}

</mosaic_0001>

<llo_original>
// kernel: tpu_custom_call.1
$region0: #{tpu_custom_call.1}
  #allocation0 [shape = 'u32[]', space=smem, size = 0x4, offset = 0x4, fixed_abs, tag = 'smem constant byte address 0x4 - core index']
  #allocation1 [shape = 'u32[72,128]{1,0:T(1,128)}', space=vmem, size = 0x9000, scoped, tag = 'internal scratch']
  %s0 = inlined_call_operand.hbm [shape: bf16[2,16,128], index: 0, kind: input, shape index: {}]
  %s1 = inlined_call_operand.hbm [shape: bf16[128,384], index: 1, kind: input, shape index: {}]
  %s2 = inlined_call_operand.hbm [shape: bf16[128,128], index: 2, kind: input, shape index: {}]
  %s3 = inlined_call_operand.vmem [shape: f32[1,128], index: 3, kind: input, shape index: {}]
  %s4 = inlined_call_operand.hbm [shape: f32[2,16,128], index: 4, kind: output, shape index: {}]
  %s5 = sld [smem:[#allocation0]]
  $region61: #{tpu_custom_call.1} parent=0
    _
  %s7 = ssub.s32 1, %s5
  %s8 = scalar_select 0, %s7, %s5
  $region1: #{tpu_custom_call.1} parent=0
    #allocation2 [shape = 'u8[8192]{0}', space=vmem, size = 0x2000, scoped, tag = 'input window, operand 0']
    #allocation3 [shape = 's32[2]{0}', space=sflag, size = 0x8, scoped, tag = 'scoped memory for tpu_custom_call.1']
    #allocation4 [shape = 's32[2]{0}', space=sflag, size = 0x8, scoped, tag = 'scoped memory for tpu_custom_call.1']
    #allocation5 [shape = 'u8[98304]{0}', space=vmem, size = 0x18000, scoped, tag = 'input window, operand 1, single buffered']
    #allocation6 [shape = 's32[1]{0}', space=sflag, size = 0x4, scoped, tag = 'scoped memory for tpu_custom_call.1']
    #allocation7 [shape = 'u8[32768]{0}', space=vmem, size = 0x8000, scoped, tag = 'input window, operand 2, single buffered']
    #allocation8 [shape = 'u8[16384]{0}', space=vmem, size = 0x4000, scoped, tag = 'output window, operand 0']
    %9 = vsyncpa [#allocation3], 0
    %s10 = scalar_lea.sflag [#allocation3], 1
    %11 = vsyncpa %s10, 0
    %12 = vsyncpa [#allocation6], 0
    %13 = vsyncpa [#allocation4], 0
    %s14 = scalar_lea.sflag [#allocation4], 1
    %15 = vsyncpa %s14, 0
    loop: start=0, step=1, limit=4
    $region2: #{tpu_custom_call.1} parent=1 // loop_pre_header
      _
    $region3: #{tpu_custom_call.1} parent=1 // loop_header
      %s17 = sphi 0, %s21
      %p18 = scmp.ge.s32.totalorder %s17, 4
      %s27 = sphi 0, %s29
      %s30 = sphi 0, %s27
      %s31 = sphi 0, %s30
      %s47 = sphi 0, %s31
      %s51 = sphi 0, %s51
      %s53 = sphi 0, %s51
      %s54 = sphi 0, %s53
      %s68 = sphi 0, %s54
      %s72 = sphi 0, %s72
      %s74 = sphi 0, %s72
      %s75 = sphi 0, %s74
      %s89 = sphi 0, %s75
      %s93 = sphi 0, %s93
      %s95 = sphi 0, %s93
      %s96 = sphi 0, %s95
      %s110 = sphi 0, %s96
      %s116 = sphi 0, %s118
      %s119 = sphi 0, %s116
      %s120 = sphi 0, %s119
      %s136 = sphi 0, %s120
    $region4: #{tpu_custom_call.1} parent=1 // loop_header_branch
      %20 = sbr.rel (%p18) target = $region8
    $region5: #{tpu_custom_call.1} parent=1 // loop_body
      %s22 = ssub.s32 %s17, 1
      %s23 = ssub.s32 %s17, 2
      %s24 = sadd.s32 %s17, 1
      %s25 = ssub.s32 %s17, %s24
      %p26 = scmp.eq.s32.totalorder %s25, 0
      %s28 = sadd.s32 %s27, 1
      %s29 = scalar_select %p26, %s27, %s28
      %p32 = pneg %p26
      %p33 = scmp.eq.s32.totalorder %s17, 1
      %p34 = por %p32, %p33
      %p35 = scmp.ne.s32.totalorder %s27, %s30
      %p36 = scmp.eq.s32.totalorder %s17, 0
      %p37 = por %p35, %p36
      %p38 = scmp.ne.s32.totalorder %s27, %s30
      %p39 = scmp.eq.s32.totalorder %s22, 1
      %p40 = por %p38, %p39
      %p41 = scmp.ne.s32.totalorder %s30, %s31
      %p42 = scmp.eq.s32.totalorder %s22, 0
      %p43 = por %p41, %p42
      %p44 = scmp.ne.s32.totalorder %s30, %s31
      %p45 = scmp.eq.s32.totalorder %s23, 1
      %p46 = por %p44, %p45
      %p48 = scmp.ne.s32.totalorder %s31, %s47
      %p49 = scmp.eq.s32.totalorder %s23, 0
      %p50 = por %p48, %p49
      %s52 = sadd.s32 %s51, 1
      %p55 = scmp.eq.s32.totalorder %s17, 1
      %p56 = scmp.ne.s32.totalorder %s51, %s53
      %p57 = scmp.eq.s32.totalorder %s17, 0
      %p58 = por %p56, %p57
      %p59 = scmp.ne.s32.totalorder %s51, %s53
      %p60 = scmp.eq.s32.totalorder %s22, 1
      %p61 = por %p59, %p60
      %p62 = scmp.ne.s32.totalorder %s53, %s54
      %p63 = scmp.eq.s32.totalorder %s22, 0
      %p64 = por %p62, %p63
      %p65 = scmp.ne.s32.totalorder %s53, %s54
      %p66 = scmp.eq.s32.totalorder %s23, 1
      %p67 = por %p65, %p66
      %p69 = scmp.ne.s32.totalorder %s54, %s68
      %p70 = scmp.eq.s32.totalorder %s23, 0
      %p71 = por %p69, %p70
      %s73 = sadd.s32 %s72, 1
      %p76 = scmp.eq.s32.totalorder %s17, 1
      %p77 = scmp.ne.s32.totalorder %s72, %s74
      %p78 = scmp.eq.s32.totalorder %s17, 0
      %p79 = por %p77, %p78
      %p80 = scmp.ne.s32.totalorder %s72, %s74
      %p81 = scmp.eq.s32.totalorder %s22, 1
      %p82 = por %p80, %p81
      %p83 = scmp.ne.s32.totalorder %s74, %s75
      %p84 = scmp.eq.s32.totalorder %s22, 0
      %p85 = por %p83, %p84
      %p86 = scmp.ne.s32.totalorder %s74, %s75
      %p87 = scmp.eq.s32.totalorder %s23, 1
      %p88 = por %p86, %p87
      %p90 = scmp.ne.s32.totalorder %s75, %s89
      %p91 = scmp.eq.s32.totalorder %s23, 0
      %p92 = por %p90, %p91
      %s94 = sadd.s32 %s93, 1
      %p97 = scmp.eq.s32.totalorder %s17, 1
      %p98 = scmp.ne.s32.totalorder %s93, %s95
      %p99 = scmp.eq.s32.totalorder %s17, 0
      %p100 = por %p98, %p99
      %p101 = scmp.ne.s32.totalorder %s93, %s95
      %p102 = scmp.eq.s32.totalorder %s22, 1
      %p103 = por %p101, %p102
      %p104 = scmp.ne.s32.totalorder %s95, %s96
      %p105 = scmp.eq.s32.totalorder %s22, 0
      %p106 = por %p104, %p105
      %p107 = scmp.ne.s32.totalorder %s95, %s96
      %p108 = scmp.eq.s32.totalorder %s23, 1
      %p109 = por %p107, %p108
      %p111 = scmp.ne.s32.totalorder %s96, %s110
      %p112 = scmp.eq.s32.totalorder %s23, 0
      %p113 = por %p111, %p112
      %s114 = ssub.s32 %s17, %s24
      %p115 = scmp.eq.s32.totalorder %s114, 0
      %s117 = sadd.s32 %s116, 1
      %s118 = scalar_select %p115, %s116, %s117
      %p121 = pneg %p115
      %p122 = scmp.eq.s32.totalorder %s17, 1
      %p123 = por %p121, %p122
      %p124 = scmp.ne.s32.totalorder %s116, %s119
      %p125 = scmp.eq.s32.totalorder %s17, 0
      %p126 = por %p124, %p125
      %p127 = scmp.ne.s32.totalorder %s116, %s119
      %p128 = scmp.eq.s32.totalorder %s22, 1
      %p129 = por %p127, %p128
      %p130 = scmp.ne.s32.totalorder %s119, %s120
      %p131 = scmp.eq.s32.totalorder %s22, 0
      %p132 = por %p130, %p131
      %p133 = scmp.ne.s32.totalorder %s119, %s120
      %p134 = scmp.eq.s32.totalorder %s23, 1
      %p135 = por %p133, %p134
      %p137 = scmp.ne.s32.totalorder %s120, %s136
      %p138 = scmp.eq.s32.totalorder %s23, 0
      %p139 = por %p137, %p138
      %p140 = scmp.le.s32.totalorder 1, %s17
      %p141 = scmp.lt.s32.totalorder %s17, 3
      %p142 = pnand %p140, %p141
      %p143 = pneg %p142
      // Predicated region
      $region9: #{tpu_custom_call.1} parent=5 // pred_check
        _
      $region10: #{tpu_custom_call.1} parent=5 // pred_check_branch
        %145 = sbr.rel (%p142) target = $region12
      $region11: #{tpu_custom_call.1} parent=5 // pred_region
        %s146 = ssub.s32 %s17, 1
        // Predicated region
        $region13: #{tpu_custom_call.1} parent=11 // pred_check
          %p147 = pneg %p64
        $region14: #{tpu_custom_call.1} parent=11 // pred_check_branch
          %149 = sbr.rel (%p147) target = $region16
        $region15: #{tpu_custom_call.1} parent=11 // pred_region
          %151 = vsyncadd [#allocation6], 0
          %s152 = sshll.u32 %s1, 4
          %s153 = int_to_ptr.hbm [resolvable:$true] %s152
          %s154 = sshll.u32 [#allocation5], 4
          %s155 = int_to_ptr.vmem [resolvable:$true] %s154
          %160 = dma.hbm_to_vmem [thread:$0]  %s153, 3072, %s155, [#allocation6], 192, 192, 12
        $region16: #{tpu_custom_call.1} parent=11 // pred_fallthru
          _
        // Predicated region
        $region17: #{tpu_custom_call.1} parent=11 // pred_check
          %p161 = pneg %p85
        $region18: #{tpu_custom_call.1} parent=11 // pred_check_branch
          %163 = sbr.rel (%p161) target = $region20
        $region19: #{tpu_custom_call.1} parent=11 // pred_region
          %165 = vsyncadd [#allocation6], 0
          %s166 = sshll.u32 %s2, 4
          %s167 = int_to_ptr.hbm [resolvable:$true] %s166
          %s168 = sshll.u32 [#allocation7], 4
          %s169 = int_to_ptr.vmem [resolvable:$true] %s168
          %174 = dma.hbm_to_vmem [thread:$0]  %s167, 1024, %s169, [#allocation6], 64, 64, 4
        $region20: #{tpu_custom_call.1} parent=11 // pred_fallthru
          _
        // Predicated region
        $region21: #{tpu_custom_call.1} parent=11 // pred_check
          %p175 = pneg %p106
        $region22: #{tpu_custom_call.1} parent=11 // pred_check_branch
          %177 = sbr.rel (%p175) target = $region24
        $region23: #{tpu_custom_call.1} parent=11 // pred_region
          _
        $region24: #{tpu_custom_call.1} parent=11 // pred_fallthru
          _
      $region12: #{tpu_custom_call.1} parent=5 // pred_fallthru
        _
      %p178 = scmp.lt.s32.totalorder %s17, 2
      // Predicated region
      $region25: #{tpu_custom_call.1} parent=5 // pred_check
        %p179 = pneg %p178
      $region26: #{tpu_custom_call.1} parent=5 // pred_check_branch
        %181 = sbr.rel (%p179) target = $region28
      $region27: #{tpu_custom_call.1} parent=5 // pred_region
        // Predicated region
        $region29: #{tpu_custom_call.1} parent=27 // pred_check
          %p182 = pneg %p37
        $region30: #{tpu_custom_call.1} parent=27 // pred_check_branch
          %184 = sbr.rel (%p182) target = $region32
        $region31: #{tpu_custom_call.1} parent=27 // pred_region
          %s185 = sand.u32 %s27, 1
          %s186 = scalar_lea.sflag [#allocation3], %s185
          %s187 = sand.u32 %s27, 1
          %s188 = smul.addr %s187, 8
          %s189 = scalar_lea.vmem [#allocation2], %s188
          %191 = vsyncadd %s186, 0
          %s192 = smul.addr %s17, 2
          %s193 = smul.addr %s192, 4
          %s194 = scalar_lea.hbm %s0, %s193
          %s195 = sshll.u32 %s194, 4
          %s196 = int_to_ptr.hbm [resolvable:$true] %s195
          %s197 = sshll.u32 %s189, 4
          %s198 = int_to_ptr.vmem [resolvable:$true] %s197
          %203 = dma.hbm_to_vmem [thread:$0]  %s196, 128, %s198, %s186, 64, 64, 4
        $region32: #{tpu_custom_call.1} parent=27 // pred_fallthru
          _
      $region28: #{tpu_custom_call.1} parent=5 // pred_fallthru
        _
      %p204 = scmp.le.s32.totalorder 1, %s17
      %p205 = scmp.lt.s32.totalorder %s17, 3
      %p206 = pnand %p204, %p205
      %p207 = pneg %p206
      // Predicated region
      $region33: #{tpu_custom_call.1} parent=5 // pred_check
        _
      $region34: #{tpu_custom_call.1} parent=5 // pred_check_branch
        %209 = sbr.rel (%p206) target = $region36
      $region35: #{tpu_custom_call.1} parent=5 // pred_region
        %s210 = ssub.s32 %s17, 1
        %s211 = sand.u32 %s30, 1
        %s212 = scalar_lea.sflag [#allocation3], %s211
        %s213 = sand.u32 %s30, 1
        %s214 = smul.addr %s213, 8
        %s215 = scalar_lea.vmem [#allocation2], %s214
        // Predicated region
        $region37: #{tpu_custom_call.1} parent=35 // pred_check
          %p216 = pneg %p43
        $region38: #{tpu_custom_call.1} parent=35 // pred_check_branch
          %218 = sbr.rel (%p216) target = $region40
        $region39: #{tpu_custom_call.1} parent=35 // pred_region
          %220 = dma.done %s212, 128
        $region40: #{tpu_custom_call.1} parent=35 // pred_fallthru
          _
        // Predicated region
        $region41: #{tpu_custom_call.1} parent=35 // pred_check
          %p221 = pneg %p64
        $region42: #{tpu_custom_call.1} parent=35 // pred_check_branch
          %223 = sbr.rel (%p221) target = $region44
        $region43: #{tpu_custom_call.1} parent=35 // pred_region
          %225 = dma.done [#allocation6], 3072
        $region44: #{tpu_custom_call.1} parent=35 // pred_fallthru
          _
        // Predicated region
        $region45: #{tpu_custom_call.1} parent=35 // pred_check
          %p226 = pneg %p85
        $region46: #{tpu_custom_call.1} parent=35 // pred_check_branch
          %228 = sbr.rel (%p226) target = $region48
        $region47: #{tpu_custom_call.1} parent=35 // pred_region
          %230 = dma.done [#allocation6], 1024
        $region48: #{tpu_custom_call.1} parent=35 // pred_fallthru
          _
        %s231 = sand.u32 %s30, 1
        %s232 = scalar_lea.sflag [#allocation3], %s231
        %s233 = sand.u32 %s30, 1
        %s234 = smul.addr %s233, 8
        %s235 = scalar_lea.vmem [#allocation2], %s234
        %p236 = pneg %p43
        %p237 = pneg %p40
        %p238 = pneg %p64
        %p239 = pneg %p61
        %p240 = pneg %p85
        %p241 = pneg %p82
        %p242 = pneg %p106
        %p243 = pneg %p103
        %p244 = pneg %p132
        %p245 = pneg %p129
        %s246 = sand.u32 %s119, 1
        %s247 = scalar_lea.sflag [#allocation4], %s246
        %s248 = sand.u32 %s119, 1
        %s249 = smul.addr %s248, 16
        %s250 = scalar_lea.vmem [#allocation8], %s249
        %v252 = vld [vmem:[%s215] sm:$0xf]
        %v253 = vld [vmem:[%s215 + $0x4] sm:$0xf]
        %v254 = vld [vmem:[#allocation5] sm:$0xff]
        %v255 = vld [vmem:[#allocation5 + $0x8] sm:$0xf]
        %v256 = vld [vmem:[#allocation5 + $0xc] sm:$0xff]
        %v257 = vld [vmem:[#allocation5 + $0x14] sm:$0xf]
        %v258 = vld [vmem:[#allocation5 + $0x18] sm:$0xff]
        %v259 = vld [vmem:[#allocation5 + $0x20] sm:$0xf]
        %v260 = vld [vmem:[#allocation5 + $0x24] sm:$0xff]
        %v261 = vld [vmem:[#allocation5 + $0x2c] sm:$0xf]
        %v262 = vld [vmem:[#allocation5 + $0x30] sm:$0xff]
        %v263 = vld [vmem:[#allocation5 + $0x38] sm:$0xf]
        %v264 = vld [vmem:[#allocation5 + $0x3c] sm:$0xff]
        %v265 = vld [vmem:[#allocation5 + $0x44] sm:$0xf]
        %v266 = vld [vmem:[#allocation5 + $0x48] sm:$0xff]
        %v267 = vld [vmem:[#allocation5 + $0x50] sm:$0xf]
        %v268 = vld [vmem:[#allocation5 + $0x54] sm:$0xff]
        %v269 = vld [vmem:[#allocation5 + $0x5c] sm:$0xf]
        %v270 = vld [vmem:[#allocation5 + $0x60] sm:$0xff]
        %v271 = vld [vmem:[#allocation5 + $0x68] sm:$0xf]
        %v272 = vld [vmem:[#allocation5 + $0x6c] sm:$0xff]
        %v273 = vld [vmem:[#allocation5 + $0x74] sm:$0xf]
        %v274 = vld [vmem:[#allocation5 + $0x78] sm:$0xff]
        %v275 = vld [vmem:[#allocation5 + $0x80] sm:$0xf]
        %v276 = vld [vmem:[#allocation5 + $0x84] sm:$0xff]
        %v277 = vld [vmem:[#allocation5 + $0x8c] sm:$0xf]
        %v278 = vld [vmem:[#allocation5 + $0x90] sm:$0xff]
        %v279 = vld [vmem:[#allocation5 + $0x98] sm:$0xf]
        %v280 = vld [vmem:[#allocation5 + $0x9c] sm:$0xff]
        %v281 = vld [vmem:[#allocation5 + $0xa4] sm:$0xf]
        %v282 = vld [vmem:[#allocation5 + $0xa8] sm:$0xff]
        %v283 = vld [vmem:[#allocation5 + $0xb0] sm:$0xf]
        %v284 = vld [vmem:[#allocation5 + $0xb4] sm:$0xff]
        %v285 = vld [vmem:[#allocation5 + $0xbc] sm:$0xf]
        %v288 = vunpack.c.l.b16 %v252
        %v289 = vunpack.c.l.b16 %v253
        %v290 = vpack.c.b16 %v289, %v288
        %v324 = vunpack.c.l.b16 %v254
        %v325 = vunpack.c.h.b16 %v254
        %v326 = vunpack.c.l.b16 %v255
        %v327 = vunpack.c.l.b16 %v256
        %v328 = vunpack.c.h.b16 %v256
        %v329 = vunpack.c.l.b16 %v257
        %v330 = vunpack.c.l.b16 %v258
        %v331 = vunpack.c.h.b16 %v258
        %v332 = vunpack.c.l.b16 %v259
        %v333 = vunpack.c.l.b16 %v260
        %v334 = vunpack.c.h.b16 %v260
        %v335 = vunpack.c.l.b16 %v261
        %v336 = vunpack.c.l.b16 %v262
        %v337 = vunpack.c.h.b16 %v262
        %v338 = vunpack.c.l.b16 %v263
        %v339 = vunpack.c.l.b16 %v264
        %v340 = vunpack.c.h.b16 %v264
        %v341 = vunpack.c.l.b16 %v265
        %v342 = vunpack.c.l.b16 %v266
        %v343 = vunpack.c.h.b16 %v266
        %v344 = vunpack.c.l.b16 %v267
        %v345 = vunpack.c.l.b16 %v268
        %v346 = vunpack.c.h.b16 %v268
        %v347 = vunpack.c.l.b16 %v269
        %v348 = vunpack.c.l.b16 %v270
        %v349 = vunpack.c.h.b16 %v270
        %v350 = vunpack.c.l.b16 %v271
        %v351 = vunpack.c.l.b16 %v272
        %v352 = vunpack.c.h.b16 %v272
        %v353 = vunpack.c.l.b16 %v273
        %v354 = vunpack.c.l.b16 %v274
        %v355 = vunpack.c.h.b16 %v274
        %v356 = vunpack.c.l.b16 %v275
        %v357 = vunpack.c.l.b16 %v276
        %v358 = vunpack.c.h.b16 %v276
        %v359 = vunpack.c.l.b16 %v277
        %v360 = vunpack.c.l.b16 %v278
        %v361 = vunpack.c.h.b16 %v278
        %v362 = vunpack.c.l.b16 %v279
        %v363 = vunpack.c.l.b16 %v280
        %v364 = vunpack.c.h.b16 %v280
        %v365 = vunpack.c.l.b16 %v281
        %v366 = vunpack.c.l.b16 %v282
        %v367 = vunpack.c.h.b16 %v282
        %v368 = vunpack.c.l.b16 %v283
        %v369 = vunpack.c.l.b16 %v284
        %v370 = vunpack.c.h.b16 %v284
        %v371 = vunpack.c.l.b16 %v285
        %v372 = vpack.c.b16 %v327, %v324
        %v373 = vpack.c.b16 %v328, %v325
        %v374 = vpack.c.b16 %v329, %v326
        %v375 = vpack.c.b16 %v333, %v330
        %v376 = vpack.c.b16 %v334, %v331
        %v377 = vpack.c.b16 %v335, %v332
        %v378 = vpack.c.b16 %v339, %v336
        %v379 = vpack.c.b16 %v340, %v337
        %v380 = vpack.c.b16 %v341, %v338
        %v381 = vpack.c.b16 %v345, %v342
        %v382 = vpack.c.b16 %v346, %v343
        %v383 = vpack.c.b16 %v347, %v344
        %v384 = vpack.c.b16 %v351, %v348
        %v385 = vpack.c.b16 %v352, %v349
        %v386 = vpack.c.b16 %v353, %v350
        %v387 = vpack.c.b16 %v357, %v354
        %v388 = vpack.c.b16 %v358, %v355
        %v389 = vpack.c.b16 %v359, %v356
        %v390 = vpack.c.b16 %v363, %v360
        %v391 = vpack.c.b16 %v364, %v361
        %v392 = vpack.c.b16 %v365, %v362
        %v393 = vpack.c.b16 %v369, %v366
        %v394 = vpack.c.b16 %v370, %v367
        %v395 = vpack.c.b16 %v371, %v368
        %420 = vmatpush.bf16.msra.mxu0 %v393
        %421 = vmatpush.bf16.msra.mxu0 %v390
        %422 = vmatpush.bf16.msra.mxu0 %v387
        %423 = vmatpush.bf16.msra.mxu0 %v384
        %424 = vmatpush.bf16.msra.mxu0 %v381
        %425 = vmatpush.bf16.msra.mxu0 %v378
        %426 = vmatpush.bf16.msra.mxu0 %v375
        %427 = vmatpush.bf16.msra.mxu0 %v372
        %428 = vmatmul.bf16.gmra.mxu0 %v290
        %v429 = vpop.f32.mrf.mxu0
        %v430 = vadd.f32 0.0, %v429
        %v431 = vpop.f32.mrf.mxu0
        %v432 = vadd.f32 0.0, %v431
        %433 = vdwg.mxu0
        %434 = vmatpush.bf16.msra.mxu0 %v394
        %435 = vmatpush.bf16.msra.mxu0 %v391
        %436 = vmatpush.bf16.msra.mxu0 %v388
        %437 = vmatpush.bf16.msra.mxu0 %v385
        %438 = vmatpush.bf16.msra.mxu0 %v382
        %439 = vmatpush.bf16.msra.mxu0 %v379
        %440 = vmatpush.bf16.msra.mxu0 %v376
        %441 = vmatpush.bf16.msra.mxu0 %v373
        %442 = vmatmul.bf16.gmra.mxu0 %v290
        %v443 = vpop.f32.mrf.mxu0
        %v444 = vadd.f32 0.0, %v443
        %v445 = vpop.f32.mrf.mxu0
        %v446 = vadd.f32 0.0, %v445
        %447 = vdwg.mxu0
        %448 = vmatpush.bf16.msra.mxu0 %v395
        %449 = vmatpush.bf16.msra.mxu0 %v392
        %450 = vmatpush.bf16.msra.mxu0 %v389
        %451 = vmatpush.bf16.msra.mxu0 %v386
        %452 = vmatpush.bf16.msra.mxu0 %v383
        %453 = vmatpush.bf16.msra.mxu0 %v380
        %454 = vmatpush.bf16.msra.mxu0 %v377
        %455 = vmatpush.bf16.msra.mxu0 %v374
        %456 = vmatmul.bf16.gmra.mxu0 %v290
        %v457 = vpop.f32.mrf.mxu0
        %v458 = vadd.f32 0.0, %v457
        %v459 = vpop.f32.mrf.mxu0
        %v460 = vadd.f32 0.0, %v459
        %461 = vdwg.mxu0
        %v462 = vpack.c.bf16 %v444, %v430
        %v463 = vpack.c.bf16 %v458, %v458
        %v464 = vpack.c.bf16 %v446, %v432
        %v465 = vpack.c.bf16 %v460, %v460
        %v468 = vunpack.c.l.b16 %v462
        %v469 = vunpack.c.l.b16 %v464
        %v470 = vpack.c.b16 %v469, %v468
        %v471 = vunpack.c.h.b16 %v462
        %v472 = vunpack.c.h.b16 %v464
        %v473 = vpack.c.b16 %v472, %v471
        %vm474 = vcmask 261120
        %v476 = vsel %vm474, %v470, 0
        %v479 = vsel %vm474, %v473, 0
        %481 = vmatpush.bf16.xpose.msra.mxu0 0
        %482 = vmatpush.bf16.xpose.msra.mxu0 0
        %483 = vmatpush.bf16.xpose.msra.mxu0 0
        %484 = vmatpush.bf16.xpose.msra.mxu0 0
        %485 = vmatpush.bf16.xpose.msra.mxu0 0
        %486 = vmatpush.bf16.xpose.msra.mxu0 0
        %487 = vmatpush.bf16.xpose.msra.mxu0 0
        %488 = vmatpush.bf16.xpose.msra.mxu0 %v479
        %489 = vmatmul.bf16.gmra.mxu0 %v476
        %v490 = vpop.f32.mrf.mxu0
        %v491 = vadd.f32 0.0, %v490
        %v492 = vpop.f32.mrf.mxu0
        %v493 = vadd.f32 0.0, %v492
        %494 = vdwg.mxu0
        %vm495 = vcmask 130048
        %v496 = vsel %vm495, %v491, -inf
        %497 = vmax.xlane.f32.xlu0 %v496
        %v498 = vpop.xlane.xlu0 %497
        %v499 = vsel %vm495, %v493, -inf
        %500 = vmax.xlane.f32.xlu0 %v499
        %v501 = vpop.xlane.xlu0 %500
        %v502 = vsub.f32 %v491, %v498
        %v503 = vsub.f32 %v493, %v501
        %v504 = vmul.f32 %v502, 1.442695
        %v505 = vpow.pop %v504
        %v506 = vmul.f32 %v503, 1.442695
        %v507 = vpow.pop %v506
        %v508 = vsel %vm495, %v505, 0.0
        %509 = vadd.xlane.f32.xlu0 %v508
        %v510 = vpop.xlane.xlu0 %509
        %v511 = vsel %vm495, %v507, 0.0
        %512 = vadd.xlane.f32.xlu0 %v511
        %v513 = vpop.xlane.xlu0 %512
        %v514 = vrcp.pop %v510
        %v515 = vrcp.pop %v513
        %v516 = vmul.f32 %v505, %v514
        %v517 = vmul.f32 %v507, %v515
        %v518 = vpack.c.bf16 %v517, %v516
        %v521 = vunpack.c.l.b16 %v463
        %v522 = vunpack.c.l.b16 %v465
        %v523 = vpack.c.b16 %v522, %v521
        %v526 = vsel %vm495, %v518, 0
        %528 = vmatpush.bf16.msra.mxu0 0
        %529 = vmatpush.bf16.msra.mxu0 0
        %530 = vmatpush.bf16.msra.mxu0 0
        %531 = vmatpush.bf16.msra.mxu0 0
        %532 = vmatpush.bf16.msra.mxu0 0
        %533 = vmatpush.bf16.msra.mxu0 0
        %534 = vmatpush.bf16.msra.mxu0 0
        %535 = vmatpush.bf16.msra.mxu0 %v523
        %536 = vmatmul.bf16.gmra.mxu0 %v526
        %v537 = vpop.f32.mrf.mxu0
        %v538 = vadd.f32 0.0, %v537
        %v539 = vpop.f32.mrf.mxu0
        %v540 = vadd.f32 0.0, %v539
        %541 = vdwg.mxu0
        %v542 = vpack.c.bf16 %v538, %v538
        %v543 = vpack.c.bf16 %v540, %v540
        %544 = vrot.lane.b32.xlu0 %v470, 96
        %v545 = vpop.permute.xlu0 %544
        %546 = vrot.lane.b32.xlu0 %v473, 96
        %v547 = vpop.permute.xlu0 %546
        %v549 = vsel %vm474, %v545, 0
        %v552 = vsel %vm474, %v547, 0
        %554 = vmatpush.bf16.xpose.msra.mxu0 0
        %555 = vmatpush.bf16.xpose.msra.mxu0 0
        %556 = vmatpush.bf16.xpose.msra.mxu0 0
        %557 = vmatpush.bf16.xpose.msra.mxu0 0
        %558 = vmatpush.bf16.xpose.msra.mxu0 0
        %559 = vmatpush.bf16.xpose.msra.mxu0 0
        %560 = vmatpush.bf16.xpose.msra.mxu0 0
        %561 = vmatpush.bf16.xpose.msra.mxu0 %v552
        %562 = vmatmul.bf16.gmra.mxu0 %v549
        %v563 = vpop.f32.mrf.mxu0
        %v564 = vadd.f32 0.0, %v563
        %v565 = vpop.f32.mrf.mxu0
        %v566 = vadd.f32 0.0, %v565
        %567 = vdwg.mxu0
        %v568 = vsel %vm495, %v564, -inf
        %569 = vmax.xlane.f32.xlu0 %v568
        %v570 = vpop.xlane.xlu0 %569
        %v571 = vsel %vm495, %v566, -inf
        %572 = vmax.xlane.f32.xlu0 %v571
        %v573 = vpop.xlane.xlu0 %572
        %v574 = vsub.f32 %v564, %v570
        %v575 = vsub.f32 %v566, %v573
        %v576 = vmul.f32 %v574, 1.442695
        %v577 = vpow.pop %v576
        %v578 = vmul.f32 %v575, 1.442695
        %v579 = vpow.pop %v578
        %v580 = vsel %vm495, %v577, 0.0
        %581 = vadd.xlane.f32.xlu0 %v580
        %v582 = vpop.xlane.xlu0 %581
        %v583 = vsel %vm495, %v579, 0.0
        %584 = vadd.xlane.f32.xlu0 %v583
        %v585 = vpop.xlane.xlu0 %584
        %v586 = vrcp.pop %v582
        %v587 = vrcp.pop %v585
        %v588 = vmul.f32 %v577, %v586
        %v589 = vmul.f32 %v579, %v587
        %v590 = vpack.c.bf16 %v589, %v588
        %591 = vrot.lane.b32.xlu0 %v523, 96
        %v592 = vpop.permute.xlu0 %591
        %v595 = vsel %vm495, %v590, 0
        %597 = vmatpush.bf16.msra.mxu0 0
        %598 = vmatpush.bf16.msra.mxu0 0
        %599 = vmatpush.bf16.msra.mxu0 0
        %600 = vmatpush.bf16.msra.mxu0 0
        %601 = vmatpush.bf16.msra.mxu0 0
        %602 = vmatpush.bf16.msra.mxu0 0
        %603 = vmatpush.bf16.msra.mxu0 0
        %604 = vmatpush.bf16.msra.mxu0 %v592
        %605 = vmatmul.bf16.gmra.mxu0 %v595
        %v606 = vpop.f32.mrf.mxu0
        %v607 = vadd.f32 0.0, %v606
        %v608 = vpop.f32.mrf.mxu0
        %v609 = vadd.f32 0.0, %v608
        %610 = vdwg.mxu0
        %v611 = vpack.c.bf16 %v607, %v607
        %v612 = vpack.c.bf16 %v609, %v609
        %613 = vrot.lane.b32.xlu0 %v470, 64
        %v614 = vpop.permute.xlu0 %613
        %615 = vrot.lane.b32.xlu0 %v473, 64
        %v616 = vpop.permute.xlu0 %615
        %v618 = vsel %vm474, %v614, 0
        %v621 = vsel %vm474, %v616, 0
        %623 = vmatpush.bf16.xpose.msra.mxu0 0
        %624 = vmatpush.bf16.xpose.msra.mxu0 0
        %625 = vmatpush.bf16.xpose.msra.mxu0 0
        %626 = vmatpush.bf16.xpose.msra.mxu0 0
        %627 = vmatpush.bf16.xpose.msra.mxu0 0
        %628 = vmatpush.bf16.xpose.msra.mxu0 0
        %629 = vmatpush.bf16.xpose.msra.mxu0 0
        %630 = vmatpush.bf16.xpose.msra.mxu0 %v621
        %631 = vmatmul.bf16.gmra.mxu0 %v618
        %v632 = vpop.f32.mrf.mxu0
        %v633 = vadd.f32 0.0, %v632
        %v634 = vpop.f32.mrf.mxu0
        %v635 = vadd.f32 0.0, %v634
        %636 = vdwg.mxu0
        %v637 = vsel %vm495, %v633, -inf
        %638 = vmax.xlane.f32.xlu0 %v637
        %v639 = vpop.xlane.xlu0 %638
        %v640 = vsel %vm495, %v635, -inf
        %641 = vmax.xlane.f32.xlu0 %v640
        %v642 = vpop.xlane.xlu0 %641
        %v643 = vsub.f32 %v633, %v639
        %v644 = vsub.f32 %v635, %v642
        %v645 = vmul.f32 %v643, 1.442695
        %v646 = vpow.pop %v645
        %v647 = vmul.f32 %v644, 1.442695
        %v648 = vpow.pop %v647
        %v649 = vsel %vm495, %v646, 0.0
        %650 = vadd.xlane.f32.xlu0 %v649
        %v651 = vpop.xlane.xlu0 %650
        %v652 = vsel %vm495, %v648, 0.0
        %653 = vadd.xlane.f32.xlu0 %v652
        %v654 = vpop.xlane.xlu0 %653
        %v655 = vrcp.pop %v651
        %v656 = vrcp.pop %v654
        %v657 = vmul.f32 %v646, %v655
        %v658 = vmul.f32 %v648, %v656
        %v659 = vpack.c.bf16 %v658, %v657
        %660 = vrot.lane.b32.xlu0 %v523, 64
        %v661 = vpop.permute.xlu0 %660
        %v664 = vsel %vm495, %v659, 0
        %666 = vmatpush.bf16.msra.mxu0 0
        %667 = vmatpush.bf16.msra.mxu0 0
        %668 = vmatpush.bf16.msra.mxu0 0
        %669 = vmatpush.bf16.msra.mxu0 0
        %670 = vmatpush.bf16.msra.mxu0 0
        %671 = vmatpush.bf16.msra.mxu0 0
        %672 = vmatpush.bf16.msra.mxu0 0
        %673 = vmatpush.bf16.msra.mxu0 %v661
        %674 = vmatmul.bf16.gmra.mxu0 %v664
        %v675 = vpop.f32.mrf.mxu0
        %v676 = vadd.f32 0.0, %v675
        %v677 = vpop.f32.mrf.mxu0
        %v678 = vadd.f32 0.0, %v677
        %679 = vdwg.mxu0
        %v680 = vpack.c.bf16 %v676, %v676
        %v681 = vpack.c.bf16 %v678, %v678
        %682 = vrot.lane.b32.xlu0 %v470, 32
        %v683 = vpop.permute.xlu0 %682
        %684 = vrot.lane.b32.xlu0 %v473, 32
        %v685 = vpop.permute.xlu0 %684
        %v687 = vsel %vm474, %v683, 0
        %v690 = vsel %vm474, %v685, 0
        %692 = vmatpush.bf16.xpose.msra.mxu0 0
        %693 = vmatpush.bf16.xpose.msra.mxu0 0
        %694 = vmatpush.bf16.xpose.msra.mxu0 0
        %695 = vmatpush.bf16.xpose.msra.mxu0 0
        %696 = vmatpush.bf16.xpose.msra.mxu0 0
        %697 = vmatpush.bf16.xpose.msra.mxu0 0
        %698 = vmatpush.bf16.xpose.msra.mxu0 0
        %699 = vmatpush.bf16.xpose.msra.mxu0 %v690
        %700 = vmatmul.bf16.gmra.mxu0 %v687
        %v701 = vpop.f32.mrf.mxu0
        %v702 = vadd.f32 0.0, %v701
        %v703 = vpop.f32.mrf.mxu0
        %v704 = vadd.f32 0.0, %v703
        %705 = vdwg.mxu0
        %v706 = vsel %vm495, %v702, -inf
        %707 = vmax.xlane.f32.xlu0 %v706
        %v708 = vpop.xlane.xlu0 %707
        %v709 = vsel %vm495, %v704, -inf
        %710 = vmax.xlane.f32.xlu0 %v709
        %v711 = vpop.xlane.xlu0 %710
        %v712 = vsub.f32 %v702, %v708
        %v713 = vsub.f32 %v704, %v711
        %v714 = vmul.f32 %v712, 1.442695
        %v715 = vpow.pop %v714
        %v716 = vmul.f32 %v713, 1.442695
        %v717 = vpow.pop %v716
        %v718 = vsel %vm495, %v715, 0.0
        %719 = vadd.xlane.f32.xlu0 %v718
        %v720 = vpop.xlane.xlu0 %719
        %v721 = vsel %vm495, %v717, 0.0
        %722 = vadd.xlane.f32.xlu0 %v721
        %v723 = vpop.xlane.xlu0 %722
        %v724 = vrcp.pop %v720
        %v725 = vrcp.pop %v723
        %v726 = vmul.f32 %v715, %v724
        %v727 = vmul.f32 %v717, %v725
        %v728 = vpack.c.bf16 %v727, %v726
        %729 = vrot.lane.b32.xlu0 %v523, 32
        %v730 = vpop.permute.xlu0 %729
        %v733 = vsel %vm495, %v728, 0
        %735 = vmatpush.bf16.msra.mxu0 0
        %736 = vmatpush.bf16.msra.mxu0 0
        %737 = vmatpush.bf16.msra.mxu0 0
        %738 = vmatpush.bf16.msra.mxu0 0
        %739 = vmatpush.bf16.msra.mxu0 0
        %740 = vmatpush.bf16.msra.mxu0 0
        %741 = vmatpush.bf16.msra.mxu0 0
        %742 = vmatpush.bf16.msra.mxu0 %v730
        %743 = vmatmul.bf16.gmra.mxu0 %v733
        %v744 = vpop.f32.mrf.mxu0
        %v745 = vadd.f32 0.0, %v744
        %v746 = vpop.f32.mrf.mxu0
        %v747 = vadd.f32 0.0, %v746
        %748 = vdwg.mxu0
        %v749 = vpack.c.bf16 %v745, %v745
        %v750 = vpack.c.bf16 %v747, %v747
        %v753 = vunpack.c.l.b16 %v542
        %v754 = vunpack.c.l.b16 %v543
        %v755 = vpack.c.b16 %v754, %v753
        %v758 = vunpack.c.l.b16 %v611
        %v759 = vunpack.c.l.b16 %v612
        %v760 = vpack.c.b16 %v759, %v758
        %761 = vrot.lane.b32.xlu0 %v760, 32
        %v762 = vpop.permute.xlu0 %761
        %v765 = vunpack.c.l.b16 %v680
        %v766 = vunpack.c.l.b16 %v681
        %v767 = vpack.c.b16 %v766, %v765
        %768 = vrot.lane.b32.xlu0 %v767, 64
        %v769 = vpop.permute.xlu0 %768
        %v772 = vunpack.c.l.b16 %v749
        %v773 = vunpack.c.l.b16 %v750
        %v774 = vpack.c.b16 %v773, %v772
        %775 = vrot.lane.b32.xlu0 %v774, 96
        %v776 = vpop.permute.xlu0 %775
        %v779 = vsel %vm474, %v755, %v762
        %vm780 = vcmask 523264
        %v782 = vsel %vm780, %v779, %v769
        %vm783 = vcmask 785408
        %v785 = vsel %vm783, %v782, %v776
        %v787 = vld [vmem:[#allocation7] sm:$0xf]
        %v788 = vld [vmem:[#allocation7 + $0x4] sm:$0xf]
        %v789 = vld [vmem:[#allocation7 + $0x8] sm:$0xf]
        %v790 = vld [vmem:[#allocation7 + $0xc] sm:$0xf]
        %v791 = vld [vmem:[#allocation7 + $0x10] sm:$0xf]
        %v792 = vld [vmem:[#allocation7 + $0x14] sm:$0xf]
        %v793 = vld [vmem:[#allocation7 + $0x18] sm:$0xf]
        %v794 = vld [vmem:[#allocation7 + $0x1c] sm:$0xf]
        %v795 = vld [vmem:[#allocation7 + $0x20] sm:$0xf]
        %v796 = vld [vmem:[#allocation7 + $0x24] sm:$0xf]
        %v797 = vld [vmem:[#allocation7 + $0x28] sm:$0xf]
        %v798 = vld [vmem:[#allocation7 + $0x2c] sm:$0xf]
        %v799 = vld [vmem:[#allocation7 + $0x30] sm:$0xf]
        %v800 = vld [vmem:[#allocation7 + $0x34] sm:$0xf]
        %v801 = vld [vmem:[#allocation7 + $0x38] sm:$0xf]
        %v802 = vld [vmem:[#allocation7 + $0x3c] sm:$0xf]
        %v803 = vld [vmem:[%s3] sm:$0x1]
        %v805 = vperm.slane %v803, 0
        %v823 = vunpack.c.l.b16 %v787
        %v824 = vunpack.c.l.b16 %v788
        %v825 = vunpack.c.l.b16 %v789
        %v826 = vunpack.c.l.b16 %v790
        %v827 = vunpack.c.l.b16 %v791
        %v828 = vunpack.c.l.b16 %v792
        %v829 = vunpack.c.l.b16 %v793
        %v830 = vunpack.c.l.b16 %v794
        %v831 = vunpack.c.l.b16 %v795
        %v832 = vunpack.c.l.b16 %v796
        %v833 = vunpack.c.l.b16 %v797
        %v834 = vunpack.c.l.b16 %v798
        %v835 = vunpack.c.l.b16 %v799
        %v836 = vunpack.c.l.b16 %v800
        %v837 = vunpack.c.l.b16 %v801
        %v838 = vunpack.c.l.b16 %v802
        %v839 = vpack.c.b16 %v824, %v823
        %v840 = vpack.c.b16 %v826, %v825
        %v841 = vpack.c.b16 %v828, %v827
        %v842 = vpack.c.b16 %v830, %v829
        %v843 = vpack.c.b16 %v832, %v831
        %v844 = vpack.c.b16 %v834, %v833
        %v845 = vpack.c.b16 %v836, %v835
        %v846 = vpack.c.b16 %v838, %v837
        %855 = vmatpush.bf16.msra.mxu0 %v846
        %856 = vmatpush.bf16.msra.mxu0 %v845
        %857 = vmatpush.bf16.msra.mxu0 %v844
        %858 = vmatpush.bf16.msra.mxu0 %v843
        %859 = vmatpush.bf16.msra.mxu0 %v842
        %860 = vmatpush.bf16.msra.mxu0 %v841
        %861 = vmatpush.bf16.msra.mxu0 %v840
        %862 = vmatpush.bf16.msra.mxu0 %v839
        %863 = vmatmul.bf16.gmra.mxu0 %v785
        %v864 = vpop.f32.mrf.mxu0
        %v865 = vadd.f32 %v805, %v864
        %v866 = vpop.f32.mrf.mxu0
        %v867 = vadd.f32 %v805, %v866
        %868 = vdwg.mxu0
        %869 = vst [vmem:[%s250] sm:$0xff] %v865
        %870 = vst [vmem:[%s250 + $0x8] sm:$0xff] %v867
        %s871 = sand.u32 %s119, 1
        %s872 = scalar_lea.sflag [#allocation4], %s871
        %s873 = sand.u32 %s119, 1
        %s874 = smul.addr %s873, 16
        %s875 = scalar_lea.vmem [#allocation8], %s874
        // Predicated region
        $region49: #{tpu_custom_call.1} parent=35 // pred_check
          %p876 = pneg %p129
        $region50: #{tpu_custom_call.1} parent=35 // pred_check_branch
          %878 = sbr.rel (%p876) target = $region52
        $region51: #{tpu_custom_call.1} parent=35 // pred_region
          %880 = vsyncadd %s872, 0
          %s881 = smul.addr %s22, 2
          %s882 = smul.addr %s881, 8
          %s883 = scalar_lea.hbm %s4, %s882
          %s884 = sshll.u32 %s875, 4
          %s885 = int_to_ptr.vmem [resolvable:$true] %s884
          %s886 = sshll.u32 %s883, 4
          %s887 = int_to_ptr.hbm [resolvable:$true] %s886
          %892 = dma.vmem_to_hbm [thread:$0]  %s885, 256, %s887, %s872, 128, 128, 8
        $region52: #{tpu_custom_call.1} parent=35 // pred_fallthru
          _
      $region36: #{tpu_custom_call.1} parent=5 // pred_fallthru
        _
      %p893 = scmp.le.s32.totalorder 2, %s17
      // Predicated region
      $region53: #{tpu_custom_call.1} parent=5 // pred_check
        %p894 = pneg %p893
      $region54: #{tpu_custom_call.1} parent=5 // pred_check_branch
        %896 = sbr.rel (%p894) target = $region56
      $region55: #{tpu_custom_call.1} parent=5 // pred_region
        %s897 = ssub.s32 %s17, 2
        // Predicated region
        $region57: #{tpu_custom_call.1} parent=55 // pred_check
          %p898 = pneg %p135
        $region58: #{tpu_custom_call.1} parent=55 // pred_check_branch
          %900 = sbr.rel (%p898) target = $region60
        $region59: #{tpu_custom_call.1} parent=55 // pred_region
          %s901 = sand.u32 %s120, 1
          %s902 = scalar_lea.sflag [#allocation4], %s901
          %s903 = sand.u32 %s120, 1
          %s904 = smul.addr %s903, 16
          %s905 = scalar_lea.vmem [#allocation8], %s904
          %907 = dma.done %s902, 256
        $region60: #{tpu_custom_call.1} parent=55 // pred_fallthru
          _
      $region56: #{tpu_custom_call.1} parent=5 // pred_fallthru
        _
    $region6: #{tpu_custom_call.1} parent=1 // loop_footer
      %s21 = sadd.s32 1, %s17
    $region7: #{tpu_custom_call.1} parent=1 // loop_footer_branch
      %16 = sbr.rel target = $region3
    $region8: #{tpu_custom_call.1} parent=1 // loop_exit
      _
    %908 = vsyncpa [#allocation3], 1
    %s909 = scalar_lea.sflag [#allocation3], 1
    %910 = vsyncpa %s909, 1
    %911 = vsyncpa [#allocation6], 1
    %912 = vsyncpa [#allocation4], 1
    %s913 = scalar_lea.sflag [#allocation4], 1
    %914 = vsyncpa %s913, 1

</llo_original>
